<compile_context>
chip_gen: v6e
topology: v6e:2x2x1
jax: 0.10.0
libtpu: 0.0.40
codegen_flags: <defaults>
</compile_context>

<pallas_src>
import functools
import math

import jax
import jax.numpy as jnp
from jax.experimental import pallas as pl
from jax.experimental.pallas import tpu as pltpu

LOG_SIG_MIN = -10.0
LOG_SIG_MAX = 2.0
ACTION_MIN = -1.0
ACTION_MAX = 1.0
ACTION_SCALE = (ACTION_MAX - ACTION_MIN) / 2.0
ACTION_BIAS = (ACTION_MAX + ACTION_MIN) / 2.0
EPSILON = 1e-6
_HALF_LOG_2PI = 0.5 * math.log(2.0 * math.pi)   # hoisted scalar constant


# ---------------------------------------------------------------------------
# Fused kernel: pi_network (2x ReLU) -> merged mean/log_sig head ->
#               reparameterized sample -> gaussian_logprob -> tanh squashing.
#
# Output slab layout along the lane axis (A = action dim):
#   [0:A)      pi       (squashed sample, scaled to action range)
#   [A:2A)     mu       (squashed deterministic mean)
#   [2A:3A)    mean     (pre-squash mean  -> forward() output)
#   [3A:4A)    log_sig  (clipped          -> forward() output)
#   [4A:4A+1)  log_pi
# ---------------------------------------------------------------------------
def _fused_policy_kernel(x_ref, noise_ref,
                         w1_ref, b1_ref, w2_ref, b2_ref, wh_ref, bh_ref,
                         out_ref):
    a = noise_ref.shape[-1]

    x = x_ref[...]
    h = jnp.dot(x, w1_ref[...], preferred_element_type=jnp.float32) + b1_ref[...]
    h = jnp.maximum(h, 0.0)                                    # ReLU
    h = jnp.dot(h, w2_ref[...], preferred_element_type=jnp.float32) + b2_ref[...]
    h = jnp.maximum(h, 0.0)                                    # ReLU (with_last_actv)

    # single MXU push for both heads: [H, 2A]
    head = jnp.dot(h, wh_ref[...], preferred_element_type=jnp.float32) + bh_ref[...]
    mean = head[:, :a]
    log_sig = jnp.clip(head[:, a:], LOG_SIG_MIN, LOG_SIG_MAX)

    # sampleNormal (reparameterization with host-supplied noise)
    noise = noise_ref[...]
    sig = jnp.exp(log_sig)
    x_t = mean + noise * sig

    # normalizePi (SAC appendix C tanh squashing)
    mu = jnp.tanh(mean) * ACTION_SCALE + ACTION_BIAS
    pi_t = jnp.tanh(x_t)
    pi = pi_t * ACTION_SCALE + ACTION_BIAS

    # gaussian_logprob + tanh correction fused into a single lane reduction
    per_dim = (-0.5 * noise * noise - log_sig
               - jnp.log(ACTION_SCALE * (1.0 - pi_t * pi_t) + EPSILON))
    log_pi = jnp.sum(per_dim, axis=-1, keepdims=True) - _HALF_LOG_2PI * a

    # single lane-contiguous output slab (one output DMA per batch tile)
    out_ref[:, 0 * a:1 * a] = pi
    out_ref[:, 1 * a:2 * a] = mu
    out_ref[:, 2 * a:3 * a] = mean
    out_ref[:, 3 * a:4 * a] = log_sig
    out_ref[:, 4 * a:4 * a + 1] = log_pi


@functools.partial(jax.jit, static_argnames=("block_b",))
def policy_forward_sample(x, noise, params, *, block_b=512):
    """Fused GaussianPolicy.sample(). Returns (pi, log_pi, mu, mean, log_sig).

    params = (w1, b1, w2, b2, wm, bm, ws, bs); weights are [in, out],
    biases are [1, out]. `noise` plays the role of torch.randn_like(mu).
    """
    w1, b1, w2, b2, wm, bm, ws, bs = params
    b, d_in = x.shape
    h1 = w1.shape[1]
    h2 = w2.shape[1]
    a = wm.shape[1]

    # merge the two heads into one weight / bias (shared LHS -> one MXU push)
    wh = jnp.concatenate([wm, ws], axis=1)       # [H, 2A]
    bh = jnp.concatenate([bm, bs], axis=1)       # [1, 2A]

    # batch tiling: whole batch in one block when small; otherwise tiles of
    # `block_b` rows (multiple of 8), zero-padded and sliced off afterwards.
    if b <= block_b:
        tb, b_pad = b, b
    else:
        tb = block_b
        b_pad = pl.cdiv(b, tb) * tb
    if b_pad != b:
        pad = ((0, b_pad - b), (0, 0))
        x = jnp.pad(x, pad)
        noise = jnp.pad(noise, pad)

    out_w = 4 * a + 1
    grid = (b_pad // tb,)

    def batch_spec(cols):
        return pl.BlockSpec((tb, cols), lambda i: (i, 0))

    def const_spec(shape):
        return pl.BlockSpec(shape, lambda i: (0, 0))   # VMEM-resident params

    param_bytes = 4 * sum(p.size for p in (w1, b1, w2, b2, wh, bh))
    cost = pl.CostEstimate(
        flops=2 * b_pad * (d_in * h1 + h1 * h2 + h2 * 2 * a),
        transcendentals=4 * b_pad * a,               # exp + 2*tanh + log
        bytes_accessed=4 * (x.size + noise.size + b_pad * out_w) + param_bytes,
    )

    slab = pl.pallas_call(
        _fused_policy_kernel,
        out_shape=jax.ShapeDtypeStruct((b_pad, out_w), jnp.float32),
        grid=grid,
        in_specs=[
            batch_spec(d_in),          # x
            batch_spec(a),             # noise
            const_spec(w1.shape),
            const_spec(b1.shape),
            const_spec(w2.shape),
            const_spec(b2.shape),
            const_spec(wh.shape),
            const_spec(bh.shape),
        ],
        out_specs=batch_spec(out_w),
        compiler_params=pltpu.CompilerParams(
            dimension_semantics=("parallel",)),       # megacore on v7x
        cost_estimate=cost,
    )(x, noise, w1, b1, w2, b2, wh, bh)

    slab = slab[:b]
    pi = slab[:, 0 * a:1 * a]
    mu = slab[:, 1 * a:2 * a]
    mean = slab[:, 2 * a:3 * a]
    log_sig = slab[:, 3 * a:4 * a]
    log_pi = slab[:, 4 * a:4 * a + 1]
    return pi, log_pi, mu, mean, log_sig


# ---------------------------------------------------------------------------
# Parameter construction (deterministic, nn.Linear-style uniform init)
# ---------------------------------------------------------------------------
def init_params(key, input_dim, hidden, action_dim):
    dims = [input_dim] + hidden
    params = []
    keys = jax.random.split(key, 2 * (len(hidden) + 2))
    k_iter = iter(keys)
    # pi_network hidden layers
    for i in range(len(hidden)):
        bound = 1.0 / math.sqrt(dims[i])
        w = jax.random.uniform(next(k_iter), (dims[i], dims[i + 1]),
                               minval=-bound, maxval=bound, dtype=jnp.float32)
        bias = jax.random.uniform(next(k_iter), (1, dims[i + 1]),
                                  minval=-bound, maxval=bound, dtype=jnp.float32)
        params += [w, bias]
    # mean_linear and log_sig_linear heads
    for _ in range(2):
        bound = 1.0 / math.sqrt(hidden[-1])
        w = jax.random.uniform(next(k_iter), (hidden[-1], action_dim),
                               minval=-bound, maxval=bound, dtype=jnp.float32)
        bias = jax.random.uniform(next(k_iter), (1, action_dim),
                                  minval=-bound, maxval=bound, dtype=jnp.float32)
        params += [w, bias]
    return tuple(params)


# ---------------------------------------------------------------------------
# Pure-JAX reference for correctness check
# ---------------------------------------------------------------------------
def reference_forward(x, params):
    w1, b1, w2, b2, wm, bm, ws, bs = params
    h = jnp.maximum(x @ w1 + b1, 0.0)
    h = jnp.maximum(h @ w2 + b2, 0.0)
    mean = h @ wm + bm
    log_sig = jnp.clip(h @ ws + bs, LOG_SIG_MIN, LOG_SIG_MAX)
    return mean, log_sig


def reference_sample(mean, log_sig, noise):
    a_dim = mean.shape[-1]
    sig = jnp.exp(log_sig)
    x_t = mean + noise * sig
    log_pi = jnp.sum(-0.5 * noise ** 2 - log_sig, -1, keepdims=True) \
        - 0.5 * math.log(2.0 * math.pi) * a_dim
    mu = jnp.tanh(mean) * ACTION_SCALE + ACTION_BIAS
    pi_t = jnp.tanh(x_t)
    log_pi = log_pi - jnp.sum(
        jnp.log(ACTION_SCALE * (1.0 - pi_t ** 2) + EPSILON), -1, keepdims=True)
    pi = pi_t * ACTION_SCALE + ACTION_BIAS
    return pi, log_pi, mu


if __name__ == "__main__":
    # Small synthetic shapes consistent with the module
    BATCH, OBS, GOAL, ACTION = 8, 24, 8, 8
    HIDDEN = [32, 32]
    INPUT_DIM = OBS + GOAL

    key = jax.random.PRNGKey(0)
    k_obs, k_goal, k_noise, k_params = jax.random.split(key, 4)

    state = jax.random.normal(k_obs, (BATCH, OBS), dtype=jnp.float32)
    goal = jax.random.normal(k_goal, (BATCH, GOAL), dtype=jnp.float32)
    x = jnp.concatenate([state, goal], axis=1)     # forward(): cat([x, goal], dim=1)

    params = init_params(k_params, INPUT_DIM, HIDDEN, ACTION)

    # sample(): host supplies noise ~ N(0, 1) (torch.randn_like equivalent)
    # TODO(synk): noise could be generated on-chip with pltpu.prng_* to drop
    # one input DMA, kept host-side here for bit-exact comparison vs reference.
    noise = jax.random.normal(k_noise, (BATCH, ACTION), dtype=jnp.float32)

    pi, log_pi, mu, mean, log_sig = policy_forward_sample(x, noise, params)
    jax.block_until_ready((pi, log_pi, mu, mean, log_sig))

    # correctness check against pure-JAX reference
    mean_r, log_sig_r = reference_forward(x, params)
    pi_r, log_pi_r, mu_r = reference_sample(mean_r, log_sig_r, noise)
    assert jnp.allclose(mean, mean_r, atol=1e-5), "mean mismatch"
    assert jnp.allclose(log_sig, log_sig_r, atol=1e-5), "log_sig mismatch"
    assert jnp.allclose(pi, pi_r, atol=1e-5), "pi mismatch"
    assert jnp.allclose(log_pi, log_pi_r, atol=1e-4), "log_pi mismatch"
    assert jnp.allclose(mu, mu_r, atol=1e-5), "mu mismatch"
    # isnan asserts from the torch module (done host-side)
    assert not bool(jnp.isnan(mean).any()), "isnan in mean!!"
    assert not bool(jnp.isnan(log_sig).any()), "isnan in log_sig!!"
    assert not bool(jnp.isnan(pi).any()), "isnan in pi!!"

    print("KERNEL_OK")
</pallas_src>

<mosaic_0001>
module attributes {stable_mosaic.version = 11 : i64} {
  func.func @_fused_policy_kernel(%arg0: i32, %arg1: memref<8x32xf32, #tpu.memory_space<vmem>>, %arg2: memref<8x8xf32, #tpu.memory_space<vmem>>, %arg3: memref<32x32xf32, #tpu.memory_space<vmem>>, %arg4: memref<1x32xf32, #tpu.memory_space<vmem>>, %arg5: memref<32x32xf32, #tpu.memory_space<vmem>>, %arg6: memref<1x32xf32, #tpu.memory_space<vmem>>, %arg7: memref<32x16xf32, #tpu.memory_space<vmem>>, %arg8: memref<1x16xf32, #tpu.memory_space<vmem>>, %arg9: memref<8x33xf32, #tpu.memory_space<vmem>>) attributes {dimension_semantics = [#tpu.dimension_semantics<parallel>], iteration_bounds = array<i64: 1>, scalar_prefetch = 0 : i64, scratch_operands = 0 : i64, tpu.core_type = #tpu.core_type<tc>, window_params = [{transform_indices = @transform_0, window_bounds = array<i64: 8, 32>}, {transform_indices = @transform_1, window_bounds = array<i64: 8, 8>}, {pipeline_mode = #tpu.pipeline_mode<synchronous>, transform_indices = @transform_2, window_bounds = array<i64: 32, 32>}, {pipeline_mode = #tpu.pipeline_mode<synchronous>, transform_indices = @transform_3, window_bounds = array<i64: 1, 32>}, {pipeline_mode = #tpu.pipeline_mode<synchronous>, transform_indices = @transform_4, window_bounds = array<i64: 32, 32>}, {pipeline_mode = #tpu.pipeline_mode<synchronous>, transform_indices = @transform_5, window_bounds = array<i64: 1, 32>}, {pipeline_mode = #tpu.pipeline_mode<synchronous>, transform_indices = @transform_6, window_bounds = array<i64: 32, 16>}, {pipeline_mode = #tpu.pipeline_mode<synchronous>, transform_indices = @transform_7, window_bounds = array<i64: 1, 16>}, {transform_indices = @transform_8, window_bounds = array<i64: 8, 33>}]} {
    %c0 = arith.constant 0 : index
    %c0_0 = arith.constant 0 : index
    %0 = vector.load %arg1[%c0, %c0_0] : memref<8x32xf32, #tpu.memory_space<vmem>>, vector<8x32xf32>
    %c0_1 = arith.constant 0 : index
    %c0_2 = arith.constant 0 : index
    %1 = vector.load %arg3[%c0_1, %c0_2] : memref<32x32xf32, #tpu.memory_space<vmem>>, vector<32x32xf32>
    %cst = arith.constant dense<0.000000e+00> : vector<8x32xf32>
    %2 = tpu.matmul %0, %1, %cst {dimension_numbers = #tpu.dot_dimension_numbers<[1], [0], [0], [1], [0, 0, 1, 1], [], []>} : vector<8x32xf32>, vector<32x32xf32>, vector<8x32xf32> -> vector<8x32xf32>
    %c0_3 = arith.constant 0 : index
    %c0_4 = arith.constant 0 : index
    %3 = vector.load %arg4[%c0_3, %c0_4] : memref<1x32xf32, #tpu.memory_space<vmem>>, vector<1x32xf32>
    %4 = vector.broadcast %3 : vector<1x32xf32> to vector<8x32xf32>
    %5 = arith.addf %2, %4 : vector<8x32xf32>
    %cst_5 = arith.constant 0.000000e+00 : f32
    %6 = vector.broadcast %cst_5 : f32 to vector<8x32xf32>
    %7 = arith.maximumf %5, %6 : vector<8x32xf32>
    %c0_6 = arith.constant 0 : index
    %c0_7 = arith.constant 0 : index
    %8 = vector.load %arg5[%c0_6, %c0_7] : memref<32x32xf32, #tpu.memory_space<vmem>>, vector<32x32xf32>
    %cst_8 = arith.constant dense<0.000000e+00> : vector<8x32xf32>
    %9 = tpu.matmul %7, %8, %cst_8 {dimension_numbers = #tpu.dot_dimension_numbers<[1], [0], [0], [1], [0, 0, 1, 1], [], []>} : vector<8x32xf32>, vector<32x32xf32>, vector<8x32xf32> -> vector<8x32xf32>
    %c0_9 = arith.constant 0 : index
    %c0_10 = arith.constant 0 : index
    %10 = vector.load %arg6[%c0_9, %c0_10] : memref<1x32xf32, #tpu.memory_space<vmem>>, vector<1x32xf32>
    %11 = vector.broadcast %10 : vector<1x32xf32> to vector<8x32xf32>
    %12 = arith.addf %9, %11 : vector<8x32xf32>
    %cst_11 = arith.constant 0.000000e+00 : f32
    %13 = vector.broadcast %cst_11 : f32 to vector<8x32xf32>
    %14 = arith.maximumf %12, %13 : vector<8x32xf32>
    %c0_12 = arith.constant 0 : index
    %c0_13 = arith.constant 0 : index
    %15 = vector.load %arg7[%c0_12, %c0_13] : memref<32x16xf32, #tpu.memory_space<vmem>>, vector<32x16xf32>
    %cst_14 = arith.constant dense<0.000000e+00> : vector<8x16xf32>
    %16 = tpu.matmul %14, %15, %cst_14 {dimension_numbers = #tpu.dot_dimension_numbers<[1], [0], [0], [1], [0, 0, 1, 1], [], []>} : vector<8x32xf32>, vector<32x16xf32>, vector<8x16xf32> -> vector<8x16xf32>
    %c0_15 = arith.constant 0 : index
    %c0_16 = arith.constant 0 : index
    %17 = vector.load %arg8[%c0_15, %c0_16] : memref<1x16xf32, #tpu.memory_space<vmem>>, vector<1x16xf32>
    %18 = vector.broadcast %17 : vector<1x16xf32> to vector<8x16xf32>
    %19 = arith.addf %16, %18 : vector<8x16xf32>
    %20 = vector.extract_strided_slice %19 {offsets = [0, 0], sizes = [8, 8], strides = [1, 1]} : vector<8x16xf32> to vector<8x8xf32>
    %21 = vector.extract_strided_slice %19 {offsets = [0, 8], sizes = [8, 8], strides = [1, 1]} : vector<8x16xf32> to vector<8x8xf32>
    %cst_17 = arith.constant -1.000000e+01 : f32
    %cst_18 = arith.constant 2.000000e+00 : f32
    %22 = vector.broadcast %cst_17 : f32 to vector<8x8xf32>
    %23 = arith.maximumf %22, %21 : vector<8x8xf32>
    %24 = vector.broadcast %cst_18 : f32 to vector<8x8xf32>
    %25 = arith.minimumf %24, %23 : vector<8x8xf32>
    %c0_19 = arith.constant 0 : index
    %c0_20 = arith.constant 0 : index
    %26 = vector.load %arg2[%c0_19, %c0_20] : memref<8x8xf32, #tpu.memory_space<vmem>>, vector<8x8xf32>
    %27 = math.exp %25 : vector<8x8xf32>
    %28 = arith.mulf %26, %27 : vector<8x8xf32>
    %29 = arith.addf %20, %28 : vector<8x8xf32>
    %30 = math.tanh %20 : vector<8x8xf32>
    %cst_21 = arith.constant 1.000000e+00 : f32
    %31 = vector.broadcast %cst_21 : f32 to vector<8x8xf32>
    %32 = arith.mulf %30, %31 : vector<8x8xf32>
    %cst_22 = arith.constant 0.000000e+00 : f32
    %33 = vector.broadcast %cst_22 : f32 to vector<8x8xf32>
    %34 = arith.addf %32, %33 : vector<8x8xf32>
    %35 = math.tanh %29 : vector<8x8xf32>
    %cst_23 = arith.constant 1.000000e+00 : f32
    %36 = vector.broadcast %cst_23 : f32 to vector<8x8xf32>
    %37 = arith.mulf %35, %36 : vector<8x8xf32>
    %cst_24 = arith.constant 0.000000e+00 : f32
    %38 = vector.broadcast %cst_24 : f32 to vector<8x8xf32>
    %39 = arith.addf %37, %38 : vector<8x8xf32>
    %cst_25 = arith.constant -5.000000e-01 : f32
    %40 = vector.broadcast %cst_25 : f32 to vector<8x8xf32>
    %41 = arith.mulf %40, %26 : vector<8x8xf32>
    %42 = arith.mulf %41, %26 : vector<8x8xf32>
    %43 = arith.subf %42, %25 : vector<8x8xf32>
    %44 = arith.mulf %35, %35 : vector<8x8xf32>
    %cst_26 = arith.constant 1.000000e+00 : f32
    %45 = vector.broadcast %cst_26 : f32 to vector<8x8xf32>
    %46 = arith.subf %45, %44 : vector<8x8xf32>
    %cst_27 = arith.constant 1.000000e+00 : f32
    %47 = vector.broadcast %cst_27 : f32 to vector<8x8xf32>
    %48 = arith.mulf %47, %46 : vector<8x8xf32>
    %cst_28 = arith.constant 9.99999997E-7 : f32
    %49 = vector.broadcast %cst_28 : f32 to vector<8x8xf32>
    %50 = arith.addf %48, %49 : vector<8x8xf32>
    %51 = math.log %50 : vector<8x8xf32>
    %52 = arith.subf %43, %51 : vector<8x8xf32>
    %cst_29 = arith.constant dense<0.000000e+00> : vector<8xf32>
    %53 = vector.multi_reduction <add>, %52, %cst_29 [1] : vector<8x8xf32> to vector<8xf32>
    %54 = vector.shape_cast %53 : vector<8xf32> to vector<8x1xf32>
    %cst_30 = arith.constant 7.35150814 : f32
    %55 = vector.broadcast %cst_30 : f32 to vector<8x1xf32>
    %56 = arith.subf %54, %55 : vector<8x1xf32>
    %c0_31 = arith.constant 0 : index
    %c0_32 = arith.constant 0 : index
    %57 = vector.load %arg9[%c0_31, %c0_32] : memref<8x33xf32, #tpu.memory_space<vmem>>, vector<8x8xf32>
    tpu.vector_store %arg9[%c0_31, %c0_32], %39 {strides = array<i32>} : memref<8x33xf32, #tpu.memory_space<vmem>>, vector<8x8xf32>,
    %c0_33 = arith.constant 0 : index
    %c8 = arith.constant 8 : index
    %58 = vector.load %arg9[%c0_33, %c8] : memref<8x33xf32, #tpu.memory_space<vmem>>, vector<8x8xf32>
    tpu.vector_store %arg9[%c0_33, %c8], %34 {strides = array<i32>} : memref<8x33xf32, #tpu.memory_space<vmem>>, vector<8x8xf32>,
    %c0_34 = arith.constant 0 : index
    %c16 = arith.constant 16 : index
    %59 = vector.load %arg9[%c0_34, %c16] : memref<8x33xf32, #tpu.memory_space<vmem>>, vector<8x8xf32>
    tpu.vector_store %arg9[%c0_34, %c16], %20 {strides = array<i32>} : memref<8x33xf32, #tpu.memory_space<vmem>>, vector<8x8xf32>,
    %c0_35 = arith.constant 0 : index
    %c24 = arith.constant 24 : index
    %60 = vector.load %arg9[%c0_35, %c24] : memref<8x33xf32, #tpu.memory_space<vmem>>, vector<8x8xf32>
    tpu.vector_store %arg9[%c0_35, %c24], %25 {strides = array<i32>} : memref<8x33xf32, #tpu.memory_space<vmem>>, vector<8x8xf32>,
    %c0_36 = arith.constant 0 : index
    %c32 = arith.constant 32 : index
    %61 = vector.load %arg9[%c0_36, %c32] : memref<8x33xf32, #tpu.memory_space<vmem>>, vector<8x1xf32>
    tpu.vector_store %arg9[%c0_36, %c32], %56 {strides = array<i32>} : memref<8x33xf32, #tpu.memory_space<vmem>>, vector<8x1xf32>,
    return
  }
  func.func @transform_0(%arg0: i32) -> (i32, i32) {
    %c0_i32 = arith.constant 0 : i32
    %c0_i32_0 = arith.constant 0 : i32
    return %arg0, %c0_i32 : i32, i32
  }
  func.func @transform_1(%arg0: i32) -> (i32, i32) {
    %c0_i32 = arith.constant 0 : i32
    %c0_i32_0 = arith.constant 0 : i32
    return %arg0, %c0_i32 : i32, i32
  }
  func.func @transform_2(%arg0: i32) -> (i32, i32) {
    %c0_i32 = arith.constant 0 : i32
    %c0_i32_0 = arith.constant 0 : i32
    %c0_i32_1 = arith.constant 0 : i32
    return %c0_i32, %c0_i32_0 : i32, i32
  }
  func.func @transform_3(%arg0: i32) -> (i32, i32) {
    %c0_i32 = arith.constant 0 : i32
    %c0_i32_0 = arith.constant 0 : i32
    %c0_i32_1 = arith.constant 0 : i32
    return %c0_i32, %c0_i32_0 : i32, i32
  }
  func.func @transform_4(%arg0: i32) -> (i32, i32) {
    %c0_i32 = arith.constant 0 : i32
    %c0_i32_0 = arith.constant 0 : i32
    %c0_i32_1 = arith.constant 0 : i32
    return %c0_i32, %c0_i32_0 : i32, i32
  }
  func.func @transform_5(%arg0: i32) -> (i32, i32) {
    %c0_i32 = arith.constant 0 : i32
    %c0_i32_0 = arith.constant 0 : i32
    %c0_i32_1 = arith.constant 0 : i32
    return %c0_i32, %c0_i32_0 : i32, i32
  }
  func.func @transform_6(%arg0: i32) -> (i32, i32) {
    %c0_i32 = arith.constant 0 : i32
    %c0_i32_0 = arith.constant 0 : i32
    %c0_i32_1 = arith.constant 0 : i32
    return %c0_i32, %c0_i32_0 : i32, i32
  }
  func.func @transform_7(%arg0: i32) -> (i32, i32) {
    %c0_i32 = arith.constant 0 : i32
    %c0_i32_0 = arith.constant 0 : i32
    %c0_i32_1 = arith.constant 0 : i32
    return %c0_i32, %c0_i32_0 : i32, i32
  }
  func.func @transform_8(%arg0: i32) -> (i32, i32) {
    %c0_i32 = arith.constant 0 : i32
    %c0_i32_0 = arith.constant 0 : i32
    return %arg0, %c0_i32 : i32, i32
  }
}

</mosaic_0001>

<llo_original>
// kernel: policy_forward_sample.1
$region0: #{policy_forward_sample.1}
  #allocation0 [shape = 'u32[]', space=smem, size = 0x4, offset = 0x4, fixed_abs, tag = 'smem constant byte address 0x4 - core index']
  #allocation1 [shape = 'u32[144,128]{1,0:T(1,128)}', space=vmem, size = 0x12000, scoped, tag = 'internal scratch']
  %s0 = inlined_call_operand.vmem [shape: f32[8,32], index: 0, kind: input, shape index: {}]
  %s1 = inlined_call_operand.vmem [shape: f32[8,8], index: 1, kind: input, shape index: {}]
  %s2 = inlined_call_operand.vmem [shape: f32[32,32], index: 2, kind: input, shape index: {}]
  %s3 = inlined_call_operand.vmem [shape: f32[1,32], index: 3, kind: input, shape index: {}]
  %s4 = inlined_call_operand.vmem [shape: f32[32,32], index: 4, kind: input, shape index: {}]
  %s5 = inlined_call_operand.vmem [shape: f32[1,32], index: 5, kind: input, shape index: {}]
  %s6 = inlined_call_operand.vmem [shape: f32[32,16], index: 6, kind: input, shape index: {}]
  %s7 = inlined_call_operand.vmem [shape: f32[1,16], index: 7, kind: input, shape index: {}]
  %s8 = inlined_call_operand.vmem [shape: f32[8,33], index: 8, kind: output, shape index: {}]
  %s9 = sld [smem:[#allocation0]]
  $region42: #{policy_forward_sample.1} parent=0
    _
  %s11 = ssub.s32 1, %s9
  %s12 = scalar_select 0, %s11, %s9
  // Predicated region
  $region2: #{policy_forward_sample.1} parent=0 // pred_check
    _
  $region3: #{policy_forward_sample.1} parent=0 // pred_check_branch
    %14 = sbr.rel (0) target = $region5
  $region4: #{policy_forward_sample.1} parent=0 // pred_region
    _
  $region5: #{policy_forward_sample.1} parent=0 // pred_fallthru
    _
  // Predicated region
  $region6: #{policy_forward_sample.1} parent=0 // pred_check
    _
  $region7: #{policy_forward_sample.1} parent=0 // pred_check_branch
    %16 = sbr.rel (0) target = $region9
  $region8: #{policy_forward_sample.1} parent=0 // pred_region
    _
  $region9: #{policy_forward_sample.1} parent=0 // pred_fallthru
    _
  // Predicated region
  $region10: #{policy_forward_sample.1} parent=0 // pred_check
    _
  $region11: #{policy_forward_sample.1} parent=0 // pred_check_branch
    %18 = sbr.rel (0) target = $region13
  $region12: #{policy_forward_sample.1} parent=0 // pred_region
    _
  $region13: #{policy_forward_sample.1} parent=0 // pred_fallthru
    _
  // Predicated region
  $region14: #{policy_forward_sample.1} parent=0 // pred_check
    _
  $region15: #{policy_forward_sample.1} parent=0 // pred_check_branch
    %20 = sbr.rel (0) target = $region17
  $region16: #{policy_forward_sample.1} parent=0 // pred_region
    _
  $region17: #{policy_forward_sample.1} parent=0 // pred_fallthru
    _
  // Predicated region
  $region18: #{policy_forward_sample.1} parent=0 // pred_check
    _
  $region19: #{policy_forward_sample.1} parent=0 // pred_check_branch
    %22 = sbr.rel (0) target = $region21
  $region20: #{policy_forward_sample.1} parent=0 // pred_region
    _
  $region21: #{policy_forward_sample.1} parent=0 // pred_fallthru
    _
  // Predicated region
  $region22: #{policy_forward_sample.1} parent=0 // pred_check
    _
  $region23: #{policy_forward_sample.1} parent=0 // pred_check_branch
    %24 = sbr.rel (0) target = $region25
  $region24: #{policy_forward_sample.1} parent=0 // pred_region
    _
  $region25: #{policy_forward_sample.1} parent=0 // pred_fallthru
    _
  // Predicated region
  $region26: #{policy_forward_sample.1} parent=0 // pred_check
    _
  $region27: #{policy_forward_sample.1} parent=0 // pred_check_branch
    %26 = sbr.rel (0) target = $region29
  $region28: #{policy_forward_sample.1} parent=0 // pred_region
    _
  $region29: #{policy_forward_sample.1} parent=0 // pred_fallthru
    _
  // Predicated region
  $region30: #{policy_forward_sample.1} parent=0 // pred_check
    _
  $region31: #{policy_forward_sample.1} parent=0 // pred_check_branch
    %28 = sbr.rel (0) target = $region33
  $region32: #{policy_forward_sample.1} parent=0 // pred_region
    _
  $region33: #{policy_forward_sample.1} parent=0 // pred_fallthru
    _
  %v29 = vld [vmem:[%s0] sm:$0xff]
  %v30 = vld [vmem:[%s2] sm:$0xff]
  %v31 = vld [vmem:[%s2 + $0x8] sm:$0xff]
  %v32 = vld [vmem:[%s2 + $0x10] sm:$0xff]
  %v33 = vld [vmem:[%s2 + $0x18] sm:$0xff]
  %v34 = vld [vmem:[%s3] sm:$0x1]
  %v36 = vlaneseq
  %v37 = vshrl.u32 %v36, 7
  %v38 = vsub.s32 0, %v37
  %v39 = vrot.slane %v34, %v38
  %vm41 = vcmask 261120
  %v43 = vsel %vm41, %v29, 0
  %45 = vmatprep.subr.mxu0 0.0
  %46 = vmatpush1.msra.mxu0 0.0
  %47 = vmatprep.subr.mxu0 0.0
  %48 = vmatpush1.msra.mxu0 0.0
  %49 = vmatprep.subr.mxu0 0.0
  %50 = vmatpush1.msra.mxu0 0.0
  %51 = vmatprep.subr.mxu0 0.0
  %52 = vmatpush1.msra.mxu0 0.0
  %53 = vmatprep.subr.mxu0 0.0
  %54 = vmatpush1.msra.mxu0 0.0
  %55 = vmatprep.subr.mxu0 0.0
  %56 = vmatpush1.msra.mxu0 0.0
  %57 = vmatprep.subr.mxu0 0.0
  %58 = vmatpush1.msra.mxu0 0.0
  %59 = vmatprep.subr.mxu0 0.0
  %60 = vmatpush1.msra.mxu0 0.0
  %61 = vmatprep.subr.mxu0 0.0
  %62 = vmatpush1.msra.mxu0 0.0
  %63 = vmatprep.subr.mxu0 0.0
  %64 = vmatpush1.msra.mxu0 0.0
  %65 = vmatprep.subr.mxu0 0.0
  %66 = vmatpush1.msra.mxu0 0.0
  %67 = vmatprep.subr.mxu0 0.0
  %68 = vmatpush1.msra.mxu0 0.0
  %69 = vmatprep.subr.mxu0 0.0
  %70 = vmatpush1.msra.mxu0 %v33
  %71 = vmatprep.subr.mxu0 0.0
  %72 = vmatpush1.msra.mxu0 %v32
  %73 = vmatprep.subr.mxu0 0.0
  %74 = vmatpush1.msra.mxu0 %v31
  %75 = vmatprep.subr.mxu0 0.0
  %76 = vmatpush1.msra.mxu0 %v30
  %77 = vmatprep.subr.mxu0 0.0
  %78 = vmatpush2.msra.mxu0 0.0
  %79 = vmatprep.subr.mxu0 0.0
  %80 = vmatpush2.msra.mxu0 0.0
  %81 = vmatprep.subr.mxu0 0.0
  %82 = vmatpush2.msra.mxu0 0.0
  %83 = vmatprep.subr.mxu0 0.0
  %84 = vmatpush2.msra.mxu0 0.0
  %85 = vmatprep.subr.mxu0 0.0
  %86 = vmatpush2.msra.mxu0 0.0
  %87 = vmatprep.subr.mxu0 0.0
  %88 = vmatpush2.msra.mxu0 0.0
  %89 = vmatprep.subr.mxu0 0.0
  %90 = vmatpush2.msra.mxu0 0.0
  %91 = vmatprep.subr.mxu0 0.0
  %92 = vmatpush2.msra.mxu0 0.0
  %93 = vmatprep.subr.mxu0 0.0
  %94 = vmatpush2.msra.mxu0 0.0
  %95 = vmatprep.subr.mxu0 0.0
  %96 = vmatpush2.msra.mxu0 0.0
  %97 = vmatprep.subr.mxu0 0.0
  %98 = vmatpush2.msra.mxu0 0.0
  %99 = vmatprep.subr.mxu0 0.0
  %100 = vmatpush2.msra.mxu0 0.0
  %101 = vmatprep.subr.mxu0 0.0
  %102 = vmatpush2.msra.mxu0 0.0
  %103 = vmatprep.subr.mxu0 0.0
  %104 = vmatpush2.msra.mxu0 0.0
  %105 = vmatprep.subr.mxu0 0.0
  %106 = vmatpush2.msra.mxu0 0.0
  %107 = vmatprep.subr.mxu0 0.0
  %108 = vmatpush2.msra.mxu0 0.0
  %109 = vmatprep.mubr.f32.mxu0 0.0
  %110 = vmatmul.mubr.f32.gmra.mxu0 %v43
  %v111 = vpop.f32.mrf.mxu0
  %v112 = vadd.f32 %v39, %v111
  %v113 = vpop.f32.mrf.mxu0
  %114 = vdwg.mxu0
  %v115 = vmax.f32 %v112, 0.0
  %v116 = vld [vmem:[%s4] sm:$0xff]
  %v117 = vld [vmem:[%s4 + $0x8] sm:$0xff]
  %v118 = vld [vmem:[%s4 + $0x10] sm:$0xff]
  %v119 = vld [vmem:[%s4 + $0x18] sm:$0xff]
  %v120 = vld [vmem:[%s5] sm:$0x1]
  %v122 = vlaneseq
  %v123 = vshrl.u32 %v122, 7
  %v124 = vsub.s32 0, %v123
  %v125 = vrot.slane %v120, %v124
  %v128 = vsel %vm41, %v115, 0
  %130 = vmatprep.subr.mxu0 0.0
  %131 = vmatpush1.msra.mxu0 0.0
  %132 = vmatprep.subr.mxu0 0.0
  %133 = vmatpush1.msra.mxu0 0.0
  %134 = vmatprep.subr.mxu0 0.0
  %135 = vmatpush1.msra.mxu0 0.0
  %136 = vmatprep.subr.mxu0 0.0
  %137 = vmatpush1.msra.mxu0 0.0
  %138 = vmatprep.subr.mxu0 0.0
  %139 = vmatpush1.msra.mxu0 0.0
  %140 = vmatprep.subr.mxu0 0.0
  %141 = vmatpush1.msra.mxu0 0.0
  %142 = vmatprep.subr.mxu0 0.0
  %143 = vmatpush1.msra.mxu0 0.0
  %144 = vmatprep.subr.mxu0 0.0
  %145 = vmatpush1.msra.mxu0 0.0
  %146 = vmatprep.subr.mxu0 0.0
  %147 = vmatpush1.msra.mxu0 0.0
  %148 = vmatprep.subr.mxu0 0.0
  %149 = vmatpush1.msra.mxu0 0.0
  %150 = vmatprep.subr.mxu0 0.0
  %151 = vmatpush1.msra.mxu0 0.0
  %152 = vmatprep.subr.mxu0 0.0
  %153 = vmatpush1.msra.mxu0 0.0
  %154 = vmatprep.subr.mxu0 0.0
  %155 = vmatpush1.msra.mxu0 %v119
  %156 = vmatprep.subr.mxu0 0.0
  %157 = vmatpush1.msra.mxu0 %v118
  %158 = vmatprep.subr.mxu0 0.0
  %159 = vmatpush1.msra.mxu0 %v117
  %160 = vmatprep.subr.mxu0 0.0
  %161 = vmatpush1.msra.mxu0 %v116
  %162 = vmatprep.subr.mxu0 0.0
  %163 = vmatpush2.msra.mxu0 0.0
  %164 = vmatprep.subr.mxu0 0.0
  %165 = vmatpush2.msra.mxu0 0.0
  %166 = vmatprep.subr.mxu0 0.0
  %167 = vmatpush2.msra.mxu0 0.0
  %168 = vmatprep.subr.mxu0 0.0
  %169 = vmatpush2.msra.mxu0 0.0
  %170 = vmatprep.subr.mxu0 0.0
  %171 = vmatpush2.msra.mxu0 0.0
  %172 = vmatprep.subr.mxu0 0.0
  %173 = vmatpush2.msra.mxu0 0.0
  %174 = vmatprep.subr.mxu0 0.0
  %175 = vmatpush2.msra.mxu0 0.0
  %176 = vmatprep.subr.mxu0 0.0
  %177 = vmatpush2.msra.mxu0 0.0
  %178 = vmatprep.subr.mxu0 0.0
  %179 = vmatpush2.msra.mxu0 0.0
  %180 = vmatprep.subr.mxu0 0.0
  %181 = vmatpush2.msra.mxu0 0.0
  %182 = vmatprep.subr.mxu0 0.0
  %183 = vmatpush2.msra.mxu0 0.0
  %184 = vmatprep.subr.mxu0 0.0
  %185 = vmatpush2.msra.mxu0 0.0
  %186 = vmatprep.subr.mxu0 0.0
  %187 = vmatpush2.msra.mxu0 0.0
  %188 = vmatprep.subr.mxu0 0.0
  %189 = vmatpush2.msra.mxu0 0.0
  %190 = vmatprep.subr.mxu0 0.0
  %191 = vmatpush2.msra.mxu0 0.0
  %192 = vmatprep.subr.mxu0 0.0
  %193 = vmatpush2.msra.mxu0 0.0
  %194 = vmatprep.mubr.f32.mxu0 0.0
  %195 = vmatmul.mubr.f32.gmra.mxu0 %v128
  %v196 = vpop.f32.mrf.mxu0
  %v197 = vadd.f32 %v125, %v196
  %v198 = vpop.f32.mrf.mxu0
  %199 = vdwg.mxu0
  %v200 = vmax.f32 %v197, 0.0
  %v201 = vld [vmem:[%s6] sm:$0xff]
  %v202 = vld [vmem:[%s6 + $0x8] sm:$0xff]
  %v203 = vld [vmem:[%s6 + $0x10] sm:$0xff]
  %v204 = vld [vmem:[%s6 + $0x18] sm:$0xff]
  %v205 = vld [vmem:[%s7] sm:$0x1]
  %v207 = vlaneseq
  %v208 = vshrl.u32 %v207, 7
  %v209 = vsub.s32 0, %v208
  %v210 = vrot.slane %v205, %v209
  %v213 = vsel %vm41, %v200, 0
  %215 = vmatprep.subr.mxu0 0.0
  %216 = vmatpush1.msra.mxu0 0.0
  %217 = vmatprep.subr.mxu0 0.0
  %218 = vmatpush1.msra.mxu0 0.0
  %219 = vmatprep.subr.mxu0 0.0
  %220 = vmatpush1.msra.mxu0 0.0
  %221 = vmatprep.subr.mxu0 0.0
  %222 = vmatpush1.msra.mxu0 0.0
  %223 = vmatprep.subr.mxu0 0.0
  %224 = vmatpush1.msra.mxu0 0.0
  %225 = vmatprep.subr.mxu0 0.0
  %226 = vmatpush1.msra.mxu0 0.0
  %227 = vmatprep.subr.mxu0 0.0
  %228 = vmatpush1.msra.mxu0 0.0
  %229 = vmatprep.subr.mxu0 0.0
  %230 = vmatpush1.msra.mxu0 0.0
  %231 = vmatprep.subr.mxu0 0.0
  %232 = vmatpush1.msra.mxu0 0.0
  %233 = vmatprep.subr.mxu0 0.0
  %234 = vmatpush1.msra.mxu0 0.0
  %235 = vmatprep.subr.mxu0 0.0
  %236 = vmatpush1.msra.mxu0 0.0
  %237 = vmatprep.subr.mxu0 0.0
  %238 = vmatpush1.msra.mxu0 0.0
  %239 = vmatprep.subr.mxu0 0.0
  %240 = vmatpush1.msra.mxu0 %v204
  %241 = vmatprep.subr.mxu0 0.0
  %242 = vmatpush1.msra.mxu0 %v203
  %243 = vmatprep.subr.mxu0 0.0
  %244 = vmatpush1.msra.mxu0 %v202
  %245 = vmatprep.subr.mxu0 0.0
  %246 = vmatpush1.msra.mxu0 %v201
  %247 = vmatprep.subr.mxu0 0.0
  %248 = vmatpush2.msra.mxu0 0.0
  %249 = vmatprep.subr.mxu0 0.0
  %250 = vmatpush2.msra.mxu0 0.0
  %251 = vmatprep.subr.mxu0 0.0
  %252 = vmatpush2.msra.mxu0 0.0
  %253 = vmatprep.subr.mxu0 0.0
  %254 = vmatpush2.msra.mxu0 0.0
  %255 = vmatprep.subr.mxu0 0.0
  %256 = vmatpush2.msra.mxu0 0.0
  %257 = vmatprep.subr.mxu0 0.0
  %258 = vmatpush2.msra.mxu0 0.0
  %259 = vmatprep.subr.mxu0 0.0
  %260 = vmatpush2.msra.mxu0 0.0
  %261 = vmatprep.subr.mxu0 0.0
  %262 = vmatpush2.msra.mxu0 0.0
  %263 = vmatprep.subr.mxu0 0.0
  %264 = vmatpush2.msra.mxu0 0.0
  %265 = vmatprep.subr.mxu0 0.0
  %266 = vmatpush2.msra.mxu0 0.0
  %267 = vmatprep.subr.mxu0 0.0
  %268 = vmatpush2.msra.mxu0 0.0
  %269 = vmatprep.subr.mxu0 0.0
  %270 = vmatpush2.msra.mxu0 0.0
  %271 = vmatprep.subr.mxu0 0.0
  %272 = vmatpush2.msra.mxu0 0.0
  %273 = vmatprep.subr.mxu0 0.0
  %274 = vmatpush2.msra.mxu0 0.0
  %275 = vmatprep.subr.mxu0 0.0
  %276 = vmatpush2.msra.mxu0 0.0
  %277 = vmatprep.subr.mxu0 0.0
  %278 = vmatpush2.msra.mxu0 0.0
  %279 = vmatprep.mubr.f32.mxu0 0.0
  %280 = vmatmul.mubr.f32.gmra.mxu0 %v213
  %v281 = vpop.f32.mrf.mxu0
  %v282 = vadd.f32 %v210, %v281
  %v283 = vpop.f32.mrf.mxu0
  %284 = vdwg.mxu0
  %v285 = vmax.f32 %v282, -10.0
  %v286 = vmin.f32 %v285, 2.0
  %v287 = vld [vmem:[%s1] sm:$0xff]
  %v288 = vmul.f32 %v286, 1.442695
  %v289 = vpow.pop %v288
  %291 = vrot.lane.b32.xlu0 %v289, 120
  %v292 = vpop.permute.xlu0 %291
  %v294 = vmul.f32 %v287, %v292
  %v295 = vadd.f32 %v282, %v294
  %v296 = vtanh.pop %v282
  %v297 = vadd.f32 %v296, 0.0
  %v298 = vtanh.pop %v295
  %v299 = vadd.f32 %v298, 0.0
  %v300 = vmul.f32 %v287, -0.5
  %v301 = vmul.f32 %v300, %v287
  %303 = vrot.lane.b32.xlu0 %v286, 120
  %v304 = vpop.permute.xlu0 %303
  %v306 = vsub.f32 %v301, %v304
  %v307 = vmul.f32 %v298, %v298
  %v308 = vsub.f32 1.0, %v307
  %v309 = vadd.f32 %v308, 1e-06
  %v310 = vlog2.pop %v309
  %v311 = vmul.f32 %v310, 0.6931472
  %v312 = vsub.f32 %v306, %v311
  %vm313 = vcmask 64512
  %v314 = vsel %vm313, %v312, 0.0
  %315 = vadd.xlane.f32.xlu0 %v314
  %v316 = vpop.xlane.xlu0 %315
  %v317 = vsub.f32 %v316, 7.351508
  %318 = vst.msk [vmem:[%s8] sm:$0xff] %vm313, %v299
  %320 = vrot.lane.b32.xlu0 %v297, 8
  %v321 = vpop.permute.xlu0 %320
  %vm323 = vcmask 130112
  %324 = vst.msk [vmem:[%s8] sm:$0xff] %vm323, %v321
  %326 = vrot.lane.b32.xlu0 %v282, 16
  %v327 = vpop.permute.xlu0 %326
  %vm329 = vcmask 195712
  %330 = vst.msk [vmem:[%s8] sm:$0xff] %vm329, %v327
  %331 = vrot.lane.b32.xlu0 %v286, 16
  %v332 = vpop.permute.xlu0 %331
  %vm334 = vcmask 261312
  %335 = vst.msk [vmem:[%s8] sm:$0xff] %vm334, %v332
  %vm336 = vcmask 269568
  %337 = vst.msk [vmem:[%s8] sm:$0xff] %vm336, %v317
  // Predicated region
  $region34: #{policy_forward_sample.1} parent=0 // pred_check
    _
  $region35: #{policy_forward_sample.1} parent=0 // pred_check_branch
    %339 = sbr.rel (0) target = $region37
  $region36: #{policy_forward_sample.1} parent=0 // pred_region
    _
  $region37: #{policy_forward_sample.1} parent=0 // pred_fallthru
    _
  // Predicated region
  $region38: #{policy_forward_sample.1} parent=0 // pred_check
    _
  $region39: #{policy_forward_sample.1} parent=0 // pred_check_branch
    %341 = sbr.rel (0) target = $region41
  $region40: #{policy_forward_sample.1} parent=0 // pred_region
    _
  $region41: #{policy_forward_sample.1} parent=0 // pred_fallthru
    _

</llo_original>
